<compile_context>
chip_gen: v7x
topology: tpu7x:2x2x1
jax: 0.10.0
libtpu: 0.0.40
codegen_flags: <defaults>
</compile_context>

<pallas_src>
import jax
import jax.numpy as jnp
from jax.experimental import pallas as pl
from jax.experimental.pallas import tpu as pltpu


_ROLL_MATCHES_JNP = None


def _roll_matches_jnp_roll():
    """Validate pltpu.roll's rotation direction on the actual lowering.

    The wrapped-column masking in the main kernel depends on the direction
    (reviewer asked to validate it before landing); cached after first call.
    """
    global _ROLL_MATCHES_JNP
    if _ROLL_MATCHES_JNP is None:
        def k(x_ref, o_ref):
            o_ref[...] = pltpu.roll(x_ref[...], shift=1, axis=0)

        x = jnp.arange(8 * 128, dtype=jnp.float32).reshape(8, 128)
        y = pl.pallas_call(
            k, out_shape=jax.ShapeDtypeStruct((8, 128), jnp.float32))(x)
        # jnp.roll semantics: result row j holds input row j-1.
        _ROLL_MATCHES_JNP = bool(y[1, 0] == x[0, 0])
    return _ROLL_MATCHES_JNP


def _pick_vmem_limit_bytes():
    # Raise the scoped-VMEM limit above the 16 MiB (v5e) / 32 MiB (v6e/v7x)
    # defaults so the compiler is never the constraint; keep headroom below
    # physical capacity (64 MiB per TC on v7x, 128 MiB on v5e/v6e).
    try:
        cap = pltpu.get_tpu_info().vmem_capacity_bytes
    except Exception:
        cap = 64 * 1024 * 1024
    return int(min(cap - 8 * 1024 * 1024, 100 * 1024 * 1024))


def asff4_forward(x0, x1, x2, params):
    """Fused ASFF_4 forward.  x*: (N, H, W, C) float32 NHWC -> (N, H, W, C) float32."""
    (w0, b0, w1, b1, w2, b2, wl, bl, wp, b3) = params
    N, H, W, C = x0.shape
    Cout = wp.shape[-1]
    HW = H * W
    # W % 16 == 0 keeps the bf16 zcat dy-slices (sublane offsets 0, W, 2W) on
    # (16,128) bf16 tile boundaries and the (H*W, C) <-> (H, W, C) reshapes
    # layout-free.  TODO(synk): pad W instead of asserting for odd sizes.
    assert W % 16 == 0, "W must be a multiple of 16"

    roll_like_jnp = _roll_matches_jnp_roll()
    left_shift = 1 if roll_like_jnp else HW - 1      # row i <- fused[i-1]
    right_shift = HW - 1 if roll_like_jnp else 1     # row i <- fused[i+1]

    # bf16 inputs: the stage is HBM-bound, halve the dominant read stream.
    x0f = x0.astype(jnp.bfloat16).reshape(N, HW, C)
    x1f = x1.astype(jnp.bfloat16).reshape(N, HW, C)
    x2f = x2.astype(jnp.bfloat16).reshape(N, HW, C)

    def kernel(x0_ref, x1_ref, x2_ref,
               w0_ref, b0_ref, w1_ref, b1_ref, w2_ref, b2_ref,
               wl_ref, bl_ref, wp_ref, b3_ref,
               out_ref, zcat_ref):
        x0v = x0_ref[0]                                   # (HW, C) bf16
        x1v = x1_ref[0]
        x2v = x2_ref[0]

        # ---- level compression: 1x1 conv (BN folded) + ReLU, bf16 x bf16 -> f32 ----
        v0 = jnp.maximum(jnp.dot(x0v, w0_ref[...],
                                 preferred_element_type=jnp.float32) + b0_ref[...], 0.0)
        v1 = jnp.maximum(jnp.dot(x1v, w1_ref[...],
                                 preferred_element_type=jnp.float32) + b1_ref[...], 0.0)
        v2 = jnp.maximum(jnp.dot(x2v, w2_ref[...],
                                 preferred_element_type=jnp.float32) + b2_ref[...], 0.0)

        # ---- weight_levels: ONE (HW, 3*COMP) x (3*COMP, 3) matmul ----
        vcat = jnp.concatenate([v0, v1, v2], axis=-1)     # (HW, 24) f32, 24 lanes -> cheap
        logits = jnp.dot(vcat, wl_ref[...],
                         preferred_element_type=jnp.float32) + bl_ref[...]   # (HW, 3)

        # ---- softmax over the 3 levels, columns kept separate ----
        # elementwise VPU max/add + EUP approx reciprocal (no cross-lane reduce)
        l0, l1, l2 = logits[:, 0:1], logits[:, 1:2], logits[:, 2:3]
        m = jnp.maximum(jnp.maximum(l0, l1), l2)
        e0 = jnp.exp(l0 - m)
        e1 = jnp.exp(l1 - m)
        e2 = jnp.exp(l2 - m)
        inv = pl.reciprocal(e0 + e1 + e2, approx=True)
        p0, p1, p2 = e0 * inv, e1 * inv, e2 * inv

        # ---- weighted fusion (bf16 inputs * f32 weights -> f32) ----
        fused = x0v * p0 + x1v * p1 + x2v * p2            # (HW, C) f32

        # ---- dx shifts: sublane roll (XLU) + boundary mask (VPU) ----
        col = jax.lax.broadcasted_iota(jnp.int32, (HW, 1), 0) % W
        left = jnp.where(col == 0, 0.0,
                         pltpu.roll(fused, shift=left_shift, axis=0))    # fused[h, w-1]
        right = jnp.where(col == W - 1, 0.0,
                          pltpu.roll(fused, shift=right_shift, axis=0))  # fused[h, w+1]

        # ---- zcat build: halo rows + ONE lane-dense 3C-wide bf16 store ----
        # Halo zeroing stays per-iteration on purpose: gating it on
        # program_id(0) == 0 is unsafe when the "parallel" batch axis is split
        # across TensorCores (a core's first iteration may have pid > 0).
        zero_row = jnp.zeros((W, 3 * C), jnp.bfloat16)
        zcat_ref[pl.ds(0, W), :] = zero_row               # top halo row (h = -1)
        zcat_ref[pl.ds((H + 1) * W, W), :] = zero_row     # bottom halo row (h = H)
        zcat_ref[pl.ds(W, HW), :] = jnp.concatenate(
            [left, fused, right], axis=-1).astype(jnp.bfloat16)

        # ---- 3x3 conv: one MXU matmul per dy; M = HW, K = 3C, f32 accumulate ----
        acc = jnp.dot(zcat_ref[pl.ds(0 * W, HW), :], wp_ref[0],
                      preferred_element_type=jnp.float32)
        acc = acc + jnp.dot(zcat_ref[pl.ds(1 * W, HW), :], wp_ref[1],
                            preferred_element_type=jnp.float32)
        acc = acc + jnp.dot(zcat_ref[pl.ds(2 * W, HW), :], wp_ref[2],
                            preferred_element_type=jnp.float32)

        out_ref[0] = jnp.maximum(acc + b3_ref[...], 0.0).astype(out_ref.dtype)

    img_in = pl.BlockSpec((1, HW, C), lambda n: (n, 0, 0))
    img_out = pl.BlockSpec((1, HW, Cout), lambda n: (n, 0, 0))

    def full_spec(a):
        return pl.BlockSpec(a.shape, lambda n, _nd=a.ndim: (0,) * _nd)

    out = pl.pallas_call(
        kernel,
        out_shape=jax.ShapeDtypeStruct((N, HW, Cout), jnp.float32),
        grid=(N,),
        in_specs=[img_in, img_in, img_in,
                  full_spec(w0), full_spec(b0),
                  full_spec(w1), full_spec(b1),
                  full_spec(w2), full_spec(b2),
                  full_spec(wl), full_spec(bl),
                  full_spec(wp), full_spec(b3)],
        out_specs=img_out,
        scratch_shapes=[pltpu.VMEM(((H + 2) * W, 3 * C), jnp.bfloat16)],
        compiler_params=pltpu.CompilerParams(
            dimension_semantics=("parallel",),
            vmem_limit_bytes=_pick_vmem_limit_bytes()),
    )(x0f, x1f, x2f, w0, b0, w1, b1, w2, b2, wl, bl, wp, b3)
    return out.reshape(N, H, W, Cout)


# ---------------------------------------------------------------------------
# Pure-JAX reference (same bf16-rounded inputs/weights, same bf16 conv-operand
# strategy, exact softmax).
# ---------------------------------------------------------------------------
def ref_forward(x0, x1, x2, params_ref):
    (w0, b0, w1, b1, w2, b2, wl, bl, w9, b3) = params_ref
    f32 = jnp.float32
    x0 = x0.astype(jnp.bfloat16).astype(f32)
    x1 = x1.astype(jnp.bfloat16).astype(f32)
    x2 = x2.astype(jnp.bfloat16).astype(f32)

    def mm(x, w):
        return jnp.einsum('nhwc,cd->nhwd', x, w.astype(f32))

    v0 = jnp.maximum(mm(x0, w0) + b0[0], 0.0)
    v1 = jnp.maximum(mm(x1, w1) + b1[0], 0.0)
    v2 = jnp.maximum(mm(x2, w2) + b2[0], 0.0)
    logits = mm(jnp.concatenate([v0, v1, v2], axis=-1), wl) + bl[0]
    p = jax.nn.softmax(logits, axis=-1)
    fused = x0 * p[..., 0:1] + x1 * p[..., 1:2] + x2 * p[..., 2:3]

    N, H, W, C = fused.shape
    xp = jnp.pad(fused.astype(jnp.bfloat16), ((0, 0), (1, 1), (1, 1), (0, 0)))
    w9b = w9.astype(jnp.bfloat16)
    acc = jnp.zeros((N, H, W, w9.shape[-1]), jnp.float32)
    for t in range(9):
        dy, dx = divmod(t, 3)
        acc = acc + jnp.einsum('nhwc,cd->nhwd', xp[:, dy:dy + H, dx:dx + W, :],
                               w9b[t], preferred_element_type=jnp.float32)
    return jnp.maximum(acc + b3[0], 0.0)


if __name__ == "__main__":
    key = jax.random.PRNGKey(0)
    N, C, H, W = 2, 32, 16, 16        # small config (module default inter_dim=512)
    COMP = 8                          # compress_c
    EPS = 1e-5
    ks = jax.random.split(key, 16)

    # PyTorch-style NCHW inputs, transposed to NHWC for the kernel.
    x0_nchw = jax.random.normal(ks[0], (N, C, H, W), jnp.float32)
    x1_nchw = jax.random.normal(ks[1], (N, C, H, W), jnp.float32)
    x2_nchw = jax.random.normal(ks[2], (N, C, H, W), jnp.float32)
    x0 = jnp.transpose(x0_nchw, (0, 2, 3, 1))
    x1 = jnp.transpose(x1_nchw, (0, 2, 3, 1))
    x2 = jnp.transpose(x2_nchw, (0, 2, 3, 1))

    def bn_params(k, c):
        k1, k2, k3, k4 = jax.random.split(k, 4)
        gamma = 1.0 + 0.1 * jax.random.normal(k1, (c,), jnp.float32)
        beta = 0.1 * jax.random.normal(k2, (c,), jnp.float32)
        mean = 0.1 * jax.random.normal(k3, (c,), jnp.float32)
        var = 1.0 + 0.1 * jax.random.uniform(k4, (c,), jnp.float32)
        return gamma, beta, mean, var

    def fold_1x1(kw, kbn, cin, cout):
        # TODO(synk): BN folded in eval mode (running stats), not train-mode batch stats.
        w = 0.1 * jax.random.normal(kw, (cin, cout), jnp.float32)
        g, b, m, v = bn_params(kbn, cout)
        s = g / jnp.sqrt(v + EPS)
        return (w * s).astype(jnp.float32), ((b - m * s)[None, :]).astype(jnp.float32)

    w0f, b0 = fold_1x1(ks[3], ks[10], C, COMP)
    w1f, b1 = fold_1x1(ks[4], ks[11], C, COMP)
    w2f, b2 = fold_1x1(ks[5], ks[12], C, COMP)
    w0b = w0f.astype(jnp.bfloat16)
    w1b = w1f.astype(jnp.bfloat16)
    w2b = w2f.astype(jnp.bfloat16)

    # weight_levels: Conv2d(3*compress_c -> 3, 1x1, bias=True), channel order
    # matches torch.cat((level_0, level_1, level_2), dim=1).
    wl = 0.1 * jax.random.normal(ks[6], (3 * COMP, 3), jnp.float32)
    bl = (0.1 * jax.random.normal(ks[7], (3,), jnp.float32))[None, :]

    # self.conv: 3x3 conv (C -> C, bias=False) + BN folded.
    w3 = 0.05 * jax.random.normal(ks[8], (3, 3, C, C), jnp.float32)   # (ky, kx, cin, cout)
    g, b, m, v = bn_params(ks[9], C)
    s = g / jnp.sqrt(v + EPS)
    w3f = (w3 * s).astype(jnp.float32)
    b3 = ((b - m * s)[None, :]).astype(jnp.float32)
    wp = w3f.reshape(3, 3 * C, C).astype(jnp.bfloat16)   # per-dy, (dx, cin)-packed, bf16
    w9 = w3f.reshape(9, C, C)                            # reference layout, f32

    params = (w0b, b0, w1b, b1, w2b, b2, wl, bl, wp, b3)
    out_nhwc = asff4_forward(x0, x1, x2, params)
    out_nhwc = jax.block_until_ready(out_nhwc)
    out_nchw = jnp.transpose(out_nhwc, (0, 3, 1, 2))     # back to PyTorch layout

    ref = ref_forward(x0, x1, x2,
                      (w0b, b0, w1b, b1, w2b, b2, wl, bl, w9, b3))
    assert out_nchw.shape == (N, C, H, W)
    assert jnp.allclose(out_nhwc, ref, rtol=2e-2, atol=2e-2), "mismatch vs reference"

    print("KERNEL_OK")
</pallas_src>

<mosaic_0001>
module attributes {stable_mosaic.version = 11 : i64} {
  func.func @k(%arg0: memref<8x128xf32, #tpu.memory_space<vmem>>, %arg1: memref<8x128xf32, #tpu.memory_space<vmem>>) attributes {dimension_semantics = [], scalar_prefetch = 0 : i64, scratch_operands = 0 : i64, tpu.core_type = #tpu.core_type<tc>} {
    %c0 = arith.constant 0 : index
    %c0_0 = arith.constant 0 : index
    %0 = vector.load %arg0[%c0, %c0_0] : memref<8x128xf32, #tpu.memory_space<vmem>>, vector<8x128xf32>
    %c1_i32 = arith.constant 1 : i32
    %1 = tpu.dynamic_rotate %0 by %c1_i32 dim 0 : vector<8x128xf32>, i32 -> vector<8x128xf32>
    %c0_1 = arith.constant 0 : index
    %c0_2 = arith.constant 0 : index
    %2 = vector.load %arg1[%c0_1, %c0_2] : memref<8x128xf32, #tpu.memory_space<vmem>>, vector<8x128xf32>
    tpu.vector_store %arg1[%c0_1, %c0_2], %1 {strides = array<i32>} : memref<8x128xf32, #tpu.memory_space<vmem>>, vector<8x128xf32>,
    return
  }
}

</mosaic_0001>

<llo_original>
// kernel: tpu_custom_call.1
$region0: #{tpu_custom_call.1}
  #allocation0 [shape = 'u32[]', space=smem, size = 0x4, offset = 0x4, fixed_abs, tag = 'smem constant byte address 0x4 - core index']
  #allocation1 [shape = 'u32[144,128]{1,0:T(1,128)}', space=vmem, size = 0x12000, scoped, tag = 'internal scratch']
  %s0 = inlined_call_operand.hbm [shape: f32[8,128], index: 0, kind: input, shape index: {}]
  %s1 = inlined_call_operand.hbm [shape: f32[8,128], index: 1, kind: output, shape index: {}]
  %s2 = sld [smem:[#allocation0]]
  $region18: #{tpu_custom_call.1} parent=0
    _
  %s4 = ssub.s32 1, %s2
  %s5 = scalar_select 0, %s4, %s2
  $region1: #{tpu_custom_call.1} parent=0
    #allocation2 [shape = 'u8[4096]{0}', space=vmem, size = 0x1000, scoped, tag = 'input window, operand 0, single buffered']
    #allocation3 [shape = 's32[1]{0}', space=sflag, size = 0x4, scoped, tag = 'scoped memory for tpu_custom_call.1']
    #allocation4 [shape = 's32[1]{0}', space=sflag, size = 0x4, scoped, tag = 'scoped memory for tpu_custom_call.1']
    #allocation5 [shape = 'u8[4096]{0}', space=vmem, size = 0x1000, scoped, tag = 'output window, operand 0, single buffered']
    %6 = vsyncpa [#allocation3], 0
    %7 = vsyncpa [#allocation4], 0
    // Predicated region
    $region2: #{tpu_custom_call.1} parent=1 // pred_check
      _
    $region3: #{tpu_custom_call.1} parent=1 // pred_check_branch
      %9 = sbr.rel (0) target = $region5
    $region4: #{tpu_custom_call.1} parent=1 // pred_region
      %s11 = ssub.s32 128, 128
      %12 = vsyncadd [#allocation3], %s11
      %s14 = sshll.u32 [#allocation2], 4
      %s15 = int_to_ptr.vmem [resolvable:$true] %s14
      %17 = dma.hbm_to_vmem [thread:$0]  %s0, 128, %s15, [#allocation3]
    $region5: #{tpu_custom_call.1} parent=1 // pred_fallthru
      _
    // Predicated region
    $region6: #{tpu_custom_call.1} parent=1 // pred_check
      _
    $region7: #{tpu_custom_call.1} parent=1 // pred_check_branch
      %19 = sbr.rel (0) target = $region9
    $region8: #{tpu_custom_call.1} parent=1 // pred_region
      %20 = dma.done [#allocation3], 128
    $region9: #{tpu_custom_call.1} parent=1 // pred_fallthru
      _
    %v21 = vld [vmem:[#allocation2] sm:$0xff]
    %v22 = vrot.slane %v21, 7
    %23 = vst [vmem:[#allocation5] sm:$0xff] %v22
    // Predicated region
    $region10: #{tpu_custom_call.1} parent=1 // pred_check
      _
    $region11: #{tpu_custom_call.1} parent=1 // pred_check_branch
      %25 = sbr.rel (0) target = $region13
    $region12: #{tpu_custom_call.1} parent=1 // pred_region
      %s27 = ssub.s32 128, 128
      %28 = vsyncadd [#allocation4], %s27
      %s30 = sshll.u32 [#allocation5], 4
      %s31 = int_to_ptr.vmem [resolvable:$true] %s30
      %33 = dma.vmem_to_hbm [thread:$0]  %s31, 128, %s1, [#allocation4]
    $region13: #{tpu_custom_call.1} parent=1 // pred_fallthru
      _
    // Predicated region
    $region14: #{tpu_custom_call.1} parent=1 // pred_check
      _
    $region15: #{tpu_custom_call.1} parent=1 // pred_check_branch
      %35 = sbr.rel (0) target = $region17
    $region16: #{tpu_custom_call.1} parent=1 // pred_region
      %36 = dma.done [#allocation4], 128
    $region17: #{tpu_custom_call.1} parent=1 // pred_fallthru
      _
    %37 = vsyncpa [#allocation3], 1
    %38 = vsyncpa [#allocation4], 1

</llo_original>
